<compile_context>
chip_gen: v6e
topology: v6e:2x2x1
jax: 0.10.0
libtpu: 0.0.40
codegen_flags: <defaults>
</compile_context>

<pallas_src>
import functools
import math

import jax
import jax.numpy as jnp
from jax.experimental import pallas as pl
from jax.experimental.pallas import tpu as pltpu

_VMEM_BUFFER_BUDGET = 32 * 1024 * 1024  # bytes for double-buffered (in + out) blocks
_VMEM_LIMIT_BYTES = 48 * 1024 * 1024    # scoped VMEM limit (< 64 MiB physical on v7x)
_FALLBACK_BLOCK_LANES = 64 * 1024       # lanes per block in the (1, total) fallback


def _scale_kernel(x_ref, o_ref, *, scale, out_dtype):
    # Single VPU multiply; cast-in / cast-out fused so DMA moves the narrow dtype.
    x = x_ref[...].astype(jnp.float32)
    o_ref[...] = (x * scale).astype(out_dtype)


def _pick_lane(total: int):
    for lane in (1024, 512, 256, 128):
        if total % lane == 0:
            return lane
    return None


def scale_forward(x: jax.Array, scale: float, out_dtype=None) -> jax.Array:
    """Pallas equivalent of Scale(scale)(x) == x * scale."""
    orig_shape = x.shape
    total = math.prod(orig_shape)  # prod(()) == 1 handles scalars

    # PyTorch promotes int_tensor * python_float to float32; keep float dtypes as-is.
    if out_dtype is None:
        out_dtype = x.dtype if jnp.issubdtype(x.dtype, jnp.floating) else jnp.float32
    out_dtype = jnp.dtype(out_dtype)

    if total == 0:  # degenerate empty tensor: no pallas_call needed
        return jnp.zeros(orig_shape, dtype=out_dtype)

    in_bytes = jnp.dtype(x.dtype).itemsize
    out_bytes = out_dtype.itemsize

    flat = x.reshape(-1)  # free bitcast view of contiguous data
    lane = _pick_lane(total)

    if lane is not None:
        # Lane-dense main path: (rows, lane), no padding, unmasked stores.
        rows = total // lane
        x2d = flat.reshape(rows, lane)
        # Rows per block from a VMEM byte budget (double-buffered in + out blocks).
        budget_rows = _VMEM_BUFFER_BUDGET // (2 * lane * (in_bytes + out_bytes))
        block_rows = max(32, (budget_rows // 32) * 32)  # multiple of 32: ok for all dtypes
        if rows <= block_rows:
            block_rows = rows  # full extent: exempt from the (8, 128) divisibility rule
        grid = (pl.cdiv(rows, block_rows),)
        block = (block_rows, lane)
        index_map = lambda r: (r, 0)
        shape2d = (rows, lane)
    else:
        # Fallback (total has no factor of 128): (1, total) view, Pallas masks the
        # partial last block -> still no pad / slice HBM round-trips.
        x2d = flat.reshape(1, total)
        block_lane = total if total <= _FALLBACK_BLOCK_LANES else _FALLBACK_BLOCK_LANES
        grid = (pl.cdiv(total, block_lane),)
        block = (1, block_lane)
        index_map = lambda i: (0, i)
        shape2d = (1, total)

    kernel = functools.partial(_scale_kernel, scale=float(scale), out_dtype=out_dtype)
    cost = pl.CostEstimate(
        flops=total,
        transcendentals=0,
        bytes_accessed=total * (in_bytes + out_bytes),
    )

    out2d = pl.pallas_call(
        kernel,
        out_shape=jax.ShapeDtypeStruct(shape2d, out_dtype),
        grid_spec=pltpu.PrefetchScalarGridSpec(
            num_scalar_prefetch=0,
            grid=grid,
            in_specs=[pl.BlockSpec(block, index_map)],
            out_specs=pl.BlockSpec(block, index_map),
        ),
        compiler_params=pltpu.CompilerParams(
            dimension_semantics=("parallel",),
            vmem_limit_bytes=_VMEM_LIMIT_BYTES,
        ),
        cost_estimate=cost,
    )(x2d)

    return out2d.reshape(orig_shape)


if __name__ == "__main__":
    # In pg_atari.py this is Scale(1/255) applied to Atari frames (NCHW).
    SCALE = 1.0 / 255.0

    key = jax.random.PRNGKey(0)
    k1, k2 = jax.random.split(key)

    # Float32 path (batch=2, channels=4, 16x16): lane-dense main path, full block.
    x = jax.random.uniform(k1, (2, 4, 16, 16), dtype=jnp.float32) * 255.0
    out = jax.block_until_ready(scale_forward(x, SCALE))
    ref = x * SCALE
    assert out.shape == ref.shape and out.dtype == ref.dtype
    assert jnp.allclose(out, ref, atol=1e-6, rtol=1e-6)

    # Fused uint8 frame path: cast + scale inside the kernel, float32 out (PyTorch promotion).
    x_u8 = jax.random.randint(k2, (2, 4, 16, 16), 0, 256, dtype=jnp.int32).astype(jnp.uint8)
    out_u8 = jax.block_until_ready(scale_forward(x_u8, SCALE))
    ref_u8 = x_u8.astype(jnp.float32) * SCALE
    assert out_u8.shape == ref_u8.shape and out_u8.dtype == jnp.float32
    assert jnp.allclose(out_u8, ref_u8, atol=1e-6, rtol=1e-6)

    # Odd element count (not a multiple of 128): exercises the padless (1, total) fallback.
    x_odd = jax.random.normal(k1, (3, 5, 7), dtype=jnp.float32)
    out_odd = jax.block_until_ready(scale_forward(x_odd, SCALE))
    assert out_odd.shape == x_odd.shape
    assert jnp.allclose(out_odd, x_odd * SCALE, atol=1e-6, rtol=1e-6)

    # Optional bf16 output for the uint8 path (flag-controlled; diverges from PyTorch's
    # float32 promotion, so only used when explicitly requested).
    out_bf16 = jax.block_until_ready(scale_forward(x_u8, SCALE, out_dtype=jnp.bfloat16))
    assert out_bf16.dtype == jnp.bfloat16
    assert jnp.allclose(out_bf16.astype(jnp.float32), ref_u8, atol=5e-3, rtol=1e-2)

    print("KERNEL_OK")
</pallas_src>

<mosaic_0001>
module attributes {stable_mosaic.version = 11 : i64} {
  func.func @_scale_kernel(%arg0: i32, %arg1: memref<2x1024xf32, #tpu.memory_space<vmem>>, %arg2: memref<2x1024xf32, #tpu.memory_space<vmem>>) attributes {dimension_semantics = [#tpu.dimension_semantics<parallel>], iteration_bounds = array<i64: 1>, scalar_prefetch = 0 : i64, scratch_operands = 0 : i64, tpu.core_type = #tpu.core_type<tc>, window_params = [{transform_indices = @transform_0, window_bounds = array<i64: 2, 1024>}, {transform_indices = @transform_1, window_bounds = array<i64: 2, 1024>}]} {
    %c0 = arith.constant 0 : index
    %c0_0 = arith.constant 0 : index
    %0 = vector.load %arg1[%c0, %c0_0] : memref<2x1024xf32, #tpu.memory_space<vmem>>, vector<2x1024xf32>
    %cst = arith.constant 0.00392156886 : f32
    %1 = vector.broadcast %cst : f32 to vector<2x1024xf32>
    %2 = arith.mulf %0, %1 : vector<2x1024xf32>
    %c0_1 = arith.constant 0 : index
    %c0_2 = arith.constant 0 : index
    %3 = vector.load %arg2[%c0_1, %c0_2] : memref<2x1024xf32, #tpu.memory_space<vmem>>, vector<2x1024xf32>
    tpu.vector_store %arg2[%c0_1, %c0_2], %2 {strides = array<i32>} : memref<2x1024xf32, #tpu.memory_space<vmem>>, vector<2x1024xf32>,
    return
  }
  func.func @transform_0(%arg0: i32) -> (i32, i32) {
    %c0_i32 = arith.constant 0 : i32
    %c0_i32_0 = arith.constant 0 : i32
    return %arg0, %c0_i32 : i32, i32
  }
  func.func @transform_1(%arg0: i32) -> (i32, i32) {
    %c0_i32 = arith.constant 0 : i32
    %c0_i32_0 = arith.constant 0 : i32
    return %arg0, %c0_i32 : i32, i32
  }
}

</mosaic_0001>

<llo_original>
// kernel: tpu_custom_call.1
$region0: #{tpu_custom_call.1}
  #allocation0 [shape = 'u32[]', space=smem, size = 0x4, offset = 0x4, fixed_abs, tag = 'smem constant byte address 0x4 - core index']
  #allocation1 [shape = 'u32[144,128]{1,0:T(1,128)}', space=vmem, size = 0x12000, scoped, tag = 'internal scratch']
  %s0 = inlined_call_operand.hbm [shape: f32[2,1024], index: 0, kind: input, shape index: {}]
  %s1 = inlined_call_operand.hbm [shape: f32[2,1024], index: 1, kind: output, shape index: {}]
  %s2 = sld [smem:[#allocation0]]
  $region18: #{tpu_custom_call.1} parent=0
    _
  %s4 = ssub.s32 1, %s2
  %s5 = scalar_select 0, %s4, %s2
  $region1: #{tpu_custom_call.1} parent=0
    #allocation2 [shape = 'u8[8192]{0}', space=vmem, size = 0x2000, scoped, tag = 'input window, operand 0, single buffered']
    #allocation3 [shape = 's32[1]{0}', space=sflag, size = 0x4, scoped, tag = 'scoped memory for tpu_custom_call.1']
    #allocation4 [shape = 's32[1]{0}', space=sflag, size = 0x4, scoped, tag = 'scoped memory for tpu_custom_call.1']
    #allocation5 [shape = 'u8[8192]{0}', space=vmem, size = 0x2000, scoped, tag = 'output window, operand 0, single buffered']
    %6 = vsyncpa [#allocation3], 0
    %7 = vsyncpa [#allocation4], 0
    // Predicated region
    $region2: #{tpu_custom_call.1} parent=1 // pred_check
      _
    $region3: #{tpu_custom_call.1} parent=1 // pred_check_branch
      %9 = sbr.rel (0) target = $region5
    $region4: #{tpu_custom_call.1} parent=1 // pred_region
      %s11 = ssub.s32 256, 256
      %12 = vsyncadd [#allocation3], %s11
      %s14 = sshll.u32 [#allocation2], 4
      %s15 = int_to_ptr.vmem [resolvable:$true] %s14
      %17 = dma.hbm_to_vmem [thread:$0]  %s0, 256, %s15, [#allocation3]
    $region5: #{tpu_custom_call.1} parent=1 // pred_fallthru
      _
    // Predicated region
    $region6: #{tpu_custom_call.1} parent=1 // pred_check
      _
    $region7: #{tpu_custom_call.1} parent=1 // pred_check_branch
      %19 = sbr.rel (0) target = $region9
    $region8: #{tpu_custom_call.1} parent=1 // pred_region
      %20 = dma.done [#allocation3], 256
    $region9: #{tpu_custom_call.1} parent=1 // pred_fallthru
      _
    %v21 = vld [vmem:[#allocation2] sm:$0xff]
    %v22 = vld [vmem:[#allocation2 + $0x8] sm:$0xff]
    %v23 = vmul.f32 %v21, 0.003921569
    %v24 = vmul.f32 %v22, 0.003921569
    %25 = vst [vmem:[#allocation5] sm:$0xff] %v23
    %26 = vst [vmem:[#allocation5 + $0x8] sm:$0xff] %v24
    // Predicated region
    $region10: #{tpu_custom_call.1} parent=1 // pred_check
      _
    $region11: #{tpu_custom_call.1} parent=1 // pred_check_branch
      %28 = sbr.rel (0) target = $region13
    $region12: #{tpu_custom_call.1} parent=1 // pred_region
      %s30 = ssub.s32 256, 256
      %31 = vsyncadd [#allocation4], %s30
      %s33 = sshll.u32 [#allocation5], 4
      %s34 = int_to_ptr.vmem [resolvable:$true] %s33
      %36 = dma.vmem_to_hbm [thread:$0]  %s34, 256, %s1, [#allocation4]
    $region13: #{tpu_custom_call.1} parent=1 // pred_fallthru
      _
    // Predicated region
    $region14: #{tpu_custom_call.1} parent=1 // pred_check
      _
    $region15: #{tpu_custom_call.1} parent=1 // pred_check_branch
      %38 = sbr.rel (0) target = $region17
    $region16: #{tpu_custom_call.1} parent=1 // pred_region
      %39 = dma.done [#allocation4], 256
    $region17: #{tpu_custom_call.1} parent=1 // pred_fallthru
      _
    %40 = vsyncpa [#allocation3], 1
    %41 = vsyncpa [#allocation4], 1

</llo_original>
